<compile_context>
chip_gen: v7x
topology: tpu7x:2x2x1
jax: 0.10.0
libtpu: 0.0.40
codegen_flags: <defaults>
</compile_context>

<pallas_src>
import jax
import jax.numpy as jnp
from jax import lax
from jax.experimental import pallas as pl
from jax.experimental.pallas import tpu as pltpu

BN_EPS = 1e-5
_MIB = 1024 * 1024


def _round_up(x, m):
    return ((x + m - 1) // m) * m


def _choose_n_tiling(n_out, tn_max=512, min_tiles=2):
    """Pad n_out only up to a multiple of 128; TN divides n_out_pad exactly."""
    n_out_pad = _round_up(n_out, 128)
    cands = [t for t in range(128, min(tn_max, n_out_pad) + 1, 128)
             if n_out_pad % t == 0]
    # Prefer the largest TN that still leaves >=2 parallel j tiles (v7x megacore);
    # harmless on single-TC parts.
    pref = [t for t in cands if n_out_pad // t >= min_tiles]
    tn = max(pref) if pref else max(cands)
    return tn, n_out_pad


def _choose_k_tiling(n_in, tk_max=1024):
    """Single full-K tile (no padding) when it fits; else balanced 128-multiple tiles."""
    if n_in <= tk_max:
        return n_in, n_in, 1
    n_in_128 = _round_up(n_in, 128)
    nk = -(-n_in_128 // tk_max)                  # ceil
    tk = _round_up(-(-n_in_128 // nk), 128)      # balanced, 128-multiple
    return tk, nk * tk, nk


def _vmem_cap_bytes():
    kind = ""
    try:
        kind = jax.devices()[0].device_kind.lower()
    except Exception:
        pass
    if ("v5" in kind) or ("v6" in kind):
        return 100 * _MIB      # 128 MiB VMEM parts: use big tiles, leave headroom
    return 48 * _MIB           # conservative / v7x-safe (64 MiB physical VMEM)


def _make_kernel(x_resident, tk, batch, nk):
    inv_b = 1.0 / float(batch)   # real (unpadded) batch size

    def _bn_relu(y, gamma, beta):
        # Folded training-mode BatchNorm1d + ReLU on the f32 accumulator.
        mean = jnp.sum(y, axis=0, keepdims=True) * inv_b
        mean_sq = jnp.sum(y * y, axis=0, keepdims=True) * inv_b
        var = jnp.maximum(mean_sq - mean * mean, 0.0)       # guard f32 cancellation
        scale = gamma * lax.rsqrt(var + BN_EPS)             # rsqrt -> EUP
        shift = beta - mean * scale
        return jnp.maximum(y * scale + shift, 0.0)

    def kernel(x_ref, w_ref, gamma_ref, beta_ref, o_ref):
        # x_ref:     (B, n_in_pad) if resident else (B, TK)   matmul dtype
        # w_ref:     (TK, TN)                                  matmul dtype (K, N layout)
        # gamma_ref: (1, TN) f32 ; beta_ref: (1, TN) f32
        # o_ref:     (B, TN) f32 — doubles as the K-axis accumulator
        k = pl.program_id(1)
        if x_resident:
            x_tile = x_ref[:, pl.ds(pl.multiple_of(k * tk, 128), tk)]
        else:
            x_tile = x_ref[...]

        partial = jnp.dot(x_tile, w_ref[...], preferred_element_type=jnp.float32)

        if nk == 1:
            o_ref[...] = _bn_relu(partial, gamma_ref[...], beta_ref[...])
        else:
            @pl.when(k == 0)
            def _init():
                o_ref[...] = jnp.zeros_like(o_ref)

            o_ref[...] += partial

            @pl.when(k == nk - 1)
            def _epilogue():
                o_ref[...] = _bn_relu(o_ref[...], gamma_ref[...], beta_ref[...])

    return kernel


def basic_layer(x, w, gamma, beta, *, matmul_dtype=jnp.bfloat16):
    """x: (B, n_in); w: (n_out, n_in) (PyTorch nn.Linear layout). Returns (B, n_out) f32."""
    B, n_in = x.shape
    n_out, n_in_w = w.shape
    assert n_in_w == n_in

    TN, n_out_pad = _choose_n_tiling(n_out)
    TK, n_in_pad, nk = _choose_k_tiling(n_in)
    nj = n_out_pad // TN

    in_bytes = jnp.dtype(matmul_dtype).itemsize
    # Keep x fully VMEM-resident (DMA'd once) when there are multiple K tiles.
    x_resident = (nk > 1) and (B * n_in_pad * in_bytes <= 8 * _MIB)

    # One-time wrapper transpose -> canonical (K, N) weight tiles on the MXU.
    wt = w.T
    if n_in_pad != n_in or n_out_pad != n_out:
        wt = jnp.pad(wt, ((0, n_in_pad - n_in), (0, n_out_pad - n_out)))
    xp = x if n_in_pad == n_in else jnp.pad(x, ((0, 0), (0, n_in_pad - n_in)))

    gp = gamma.reshape(1, n_out).astype(jnp.float32)
    bp = beta.reshape(1, n_out).astype(jnp.float32)
    if n_out_pad != n_out:
        gp = jnp.pad(gp, ((0, 0), (0, n_out_pad - n_out)), constant_values=1.0)
        bp = jnp.pad(bp, ((0, 0), (0, n_out_pad - n_out)))

    xp = xp.astype(matmul_dtype)
    wt = wt.astype(matmul_dtype)

    if x_resident:
        x_spec = pl.BlockSpec((B, n_in_pad), lambda j, k: (0, 0))
        x_vmem = 2 * B * n_in_pad * in_bytes
    else:
        x_spec = pl.BlockSpec((B, TK), lambda j, k: (0, k))
        x_vmem = 2 * B * TK * in_bytes

    vmem_est = (x_vmem
                + 2 * TK * TN * in_bytes      # double-buffered weight tile
                + 2 * B * TN * 4              # double-buffered f32 output/accumulator
                + 2 * 2 * TN * 4)             # gamma / beta
    vmem_limit = int(min(max(2 * vmem_est, 32 * _MIB), _vmem_cap_bytes()))

    cost = pl.CostEstimate(
        flops=2 * B * n_in_pad * n_out_pad,
        transcendentals=0,
        bytes_accessed=(xp.size * in_bytes + wt.size * in_bytes
                        + B * n_out_pad * 4),
    )

    kernel = _make_kernel(x_resident, TK, B, nk)

    out = pl.pallas_call(
        kernel,
        out_shape=jax.ShapeDtypeStruct((B, n_out_pad), jnp.float32),
        grid_spec=pltpu.PrefetchScalarGridSpec(
            num_scalar_prefetch=0,
            grid=(nj, nk),                                   # (n_out tiles, K tiles)
            in_specs=[
                x_spec,                                      # x
                pl.BlockSpec((TK, TN), lambda j, k: (k, j)), # w^T (n_in, n_out) tile
                pl.BlockSpec((1, TN), lambda j, k: (0, j)),  # gamma
                pl.BlockSpec((1, TN), lambda j, k: (0, j)),  # beta
            ],
            out_specs=pl.BlockSpec((B, TN), lambda j, k: (0, j)),
        ),
        compiler_params=pltpu.CompilerParams(
            dimension_semantics=("parallel", "arbitrary"),
            vmem_limit_bytes=vmem_limit,
        ),
        cost_estimate=cost,
    )(xp, wt, gp, bp)

    return out[:, :n_out]


def reference(x, w, gamma, beta):
    y = x @ w.T
    mean = jnp.mean(y, axis=0, keepdims=True)
    var = jnp.mean((y - mean) ** 2, axis=0, keepdims=True)
    y_hat = (y - mean) / jnp.sqrt(var + BN_EPS)
    return jnp.maximum(y_hat * gamma[None, :] + beta[None, :], 0.0)


if __name__ == "__main__":
    key = jax.random.PRNGKey(0)
    keys = jax.random.split(key, 8)

    # --- small module-consistent shapes (single-tile path) ------------------
    B, n_in, n_out = 8, 32, 64
    x = jax.random.normal(keys[0], (B, n_in), dtype=jnp.float32)
    bound = 1.0 / (n_in ** 0.5)
    w = jax.random.uniform(keys[1], (n_out, n_in), minval=-bound, maxval=bound,
                           dtype=jnp.float32)
    gamma = jnp.ones((n_out,), dtype=jnp.float32)    # fresh nn.BatchNorm1d affine
    beta = jnp.zeros((n_out,), dtype=jnp.float32)

    out_f32 = jax.block_until_ready(
        basic_layer(x, w, gamma, beta, matmul_dtype=jnp.float32))
    ref = reference(x, w, gamma, beta)
    assert out_f32.shape == (B, n_out)
    assert jnp.allclose(out_f32, ref, atol=1e-4, rtol=1e-4), "f32 mismatch vs reference"

    # Default (bf16 matmul operands, f32 accumulation/epilogue).
    out_bf16 = jax.block_until_ready(basic_layer(x, w, gamma, beta))
    x_r = x.astype(jnp.bfloat16).astype(jnp.float32)
    w_r = w.astype(jnp.bfloat16).astype(jnp.float32)
    ref_bf16 = reference(x_r, w_r, gamma, beta)
    assert jnp.allclose(out_bf16, ref_bf16, atol=5e-3, rtol=5e-3), "bf16 mismatch"

    # --- gridded shape: n_out=384 -> 3x TN=128 (no padding), single K tile --
    B2, n_in2, n_out2 = 16, 640, 384
    x2 = jax.random.normal(keys[2], (B2, n_in2), dtype=jnp.float32)
    bound2 = 1.0 / (n_in2 ** 0.5)
    w2 = jax.random.uniform(keys[3], (n_out2, n_in2), minval=-bound2, maxval=bound2,
                            dtype=jnp.float32)
    gamma2 = jax.random.uniform(keys[4], (n_out2,), minval=0.5, maxval=1.5,
                                dtype=jnp.float32)
    beta2 = 0.1 * jax.random.normal(keys[5], (n_out2,), dtype=jnp.float32)

    out2 = jax.block_until_ready(basic_layer(x2, w2, gamma2, beta2))
    ref2 = reference(x2.astype(jnp.bfloat16).astype(jnp.float32),
                     w2.astype(jnp.bfloat16).astype(jnp.float32), gamma2, beta2)
    assert out2.shape == (B2, n_out2)
    assert jnp.allclose(out2, ref2, atol=5e-3, rtol=5e-3), "gridded mismatch"

    # --- multi-K-tile path: n_in=2304 -> 3x TK=768, resident x ---------------
    B3, n_in3, n_out3 = 16, 2304, 256
    x3 = jax.random.normal(keys[6], (B3, n_in3), dtype=jnp.float32)
    bound3 = 1.0 / (n_in3 ** 0.5)
    w3 = jax.random.uniform(keys[7], (n_out3, n_in3), minval=-bound3, maxval=bound3,
                            dtype=jnp.float32)
    gamma3 = jnp.ones((n_out3,), dtype=jnp.float32)
    beta3 = jnp.zeros((n_out3,), dtype=jnp.float32)

    out3 = jax.block_until_ready(basic_layer(x3, w3, gamma3, beta3))
    ref3 = reference(x3.astype(jnp.bfloat16).astype(jnp.float32),
                     w3.astype(jnp.bfloat16).astype(jnp.float32), gamma3, beta3)
    assert out3.shape == (B3, n_out3)
    assert jnp.allclose(out3, ref3, atol=5e-3, rtol=5e-3), "multi-K mismatch"

    # TODO(synk): BatchNorm1d running_mean/running_var buffer updates (training-
    # mode side effect) are not modeled; only the forward output is produced.
    print("KERNEL_OK")
</pallas_src>

<mosaic_0001>
module attributes {stable_mosaic.version = 11 : i64} {
  func.func @kernel(%arg0: i32, %arg1: i32, %arg2: memref<8x32xf32, #tpu.memory_space<vmem>>, %arg3: memref<32x128xf32, #tpu.memory_space<vmem>>, %arg4: memref<1x128xf32, #tpu.memory_space<vmem>>, %arg5: memref<1x128xf32, #tpu.memory_space<vmem>>, %arg6: memref<8x128xf32, #tpu.memory_space<vmem>>) attributes {dimension_semantics = [#tpu.dimension_semantics<parallel>, #tpu.dimension_semantics<arbitrary>], iteration_bounds = array<i64: 1, 1>, scalar_prefetch = 0 : i64, scratch_operands = 0 : i64, tpu.core_type = #tpu.core_type<tc>, window_params = [{transform_indices = @transform_0, window_bounds = array<i64: 8, 32>}, {transform_indices = @transform_1, window_bounds = array<i64: 32, 128>}, {transform_indices = @transform_2, window_bounds = array<i64: 1, 128>}, {transform_indices = @transform_3, window_bounds = array<i64: 1, 128>}, {transform_indices = @transform_4, window_bounds = array<i64: 8, 128>}]} {
    %c0 = arith.constant 0 : index
    %c0_0 = arith.constant 0 : index
    %0 = vector.load %arg2[%c0, %c0_0] : memref<8x32xf32, #tpu.memory_space<vmem>>, vector<8x32xf32>
    %c0_1 = arith.constant 0 : index
    %c0_2 = arith.constant 0 : index
    %1 = vector.load %arg3[%c0_1, %c0_2] : memref<32x128xf32, #tpu.memory_space<vmem>>, vector<32x128xf32>
    %cst = arith.constant dense<0.000000e+00> : vector<8x128xf32>
    %2 = tpu.matmul %0, %1, %cst {dimension_numbers = #tpu.dot_dimension_numbers<[1], [0], [0], [1], [0, 0, 1, 1], [], []>} : vector<8x32xf32>, vector<32x128xf32>, vector<8x128xf32> -> vector<8x128xf32>
    %c0_3 = arith.constant 0 : index
    %c0_4 = arith.constant 0 : index
    %3 = vector.load %arg4[%c0_3, %c0_4] : memref<1x128xf32, #tpu.memory_space<vmem>>, vector<1x128xf32>
    %c0_5 = arith.constant 0 : index
    %c0_6 = arith.constant 0 : index
    %4 = vector.load %arg5[%c0_5, %c0_6] : memref<1x128xf32, #tpu.memory_space<vmem>>, vector<1x128xf32>
    %cst_7 = arith.constant dense<0.000000e+00> : vector<128xf32>
    %5 = vector.multi_reduction <add>, %2, %cst_7 [0] : vector<8x128xf32> to vector<128xf32>
    %6 = vector.shape_cast %5 : vector<128xf32> to vector<1x128xf32>
    %cst_8 = arith.constant 1.250000e-01 : f32
    %7 = vector.broadcast %cst_8 : f32 to vector<1x128xf32>
    %8 = arith.mulf %6, %7 : vector<1x128xf32>
    %9 = arith.mulf %2, %2 : vector<8x128xf32>
    %cst_9 = arith.constant dense<0.000000e+00> : vector<128xf32>
    %10 = vector.multi_reduction <add>, %9, %cst_9 [0] : vector<8x128xf32> to vector<128xf32>
    %11 = vector.shape_cast %10 : vector<128xf32> to vector<1x128xf32>
    %cst_10 = arith.constant 1.250000e-01 : f32
    %12 = vector.broadcast %cst_10 : f32 to vector<1x128xf32>
    %13 = arith.mulf %11, %12 : vector<1x128xf32>
    %14 = arith.mulf %8, %8 : vector<1x128xf32>
    %15 = arith.subf %13, %14 : vector<1x128xf32>
    %cst_11 = arith.constant 0.000000e+00 : f32
    %16 = vector.broadcast %cst_11 : f32 to vector<1x128xf32>
    %17 = arith.maximumf %15, %16 : vector<1x128xf32>
    %cst_12 = arith.constant 9.99999974E-6 : f32
    %18 = vector.broadcast %cst_12 : f32 to vector<1x128xf32>
    %19 = arith.addf %17, %18 : vector<1x128xf32>
    %20 = math.rsqrt %19 : vector<1x128xf32>
    %21 = arith.mulf %3, %20 : vector<1x128xf32>
    %22 = arith.mulf %8, %21 : vector<1x128xf32>
    %23 = arith.subf %4, %22 : vector<1x128xf32>
    %24 = vector.broadcast %21 : vector<1x128xf32> to vector<8x128xf32>
    %25 = arith.mulf %2, %24 : vector<8x128xf32>
    %26 = vector.broadcast %23 : vector<1x128xf32> to vector<8x128xf32>
    %27 = arith.addf %25, %26 : vector<8x128xf32>
    %cst_13 = arith.constant 0.000000e+00 : f32
    %28 = vector.broadcast %cst_13 : f32 to vector<8x128xf32>
    %29 = arith.maximumf %27, %28 : vector<8x128xf32>
    %c0_14 = arith.constant 0 : index
    %c0_15 = arith.constant 0 : index
    %30 = vector.load %arg6[%c0_14, %c0_15] : memref<8x128xf32, #tpu.memory_space<vmem>>, vector<8x128xf32>
    tpu.vector_store %arg6[%c0_14, %c0_15], %29 {strides = array<i32>} : memref<8x128xf32, #tpu.memory_space<vmem>>, vector<8x128xf32>,
    return
  }
  func.func @transform_0(%arg0: i32, %arg1: i32) -> (i32, i32) {
    %c0_i32 = arith.constant 0 : i32
    %c0_i32_0 = arith.constant 0 : i32
    return %c0_i32, %arg1 : i32, i32
  }
  func.func @transform_1(%arg0: i32, %arg1: i32) -> (i32, i32) {
    %c0_i32 = arith.constant 0 : i32
    return %arg1, %arg0 : i32, i32
  }
  func.func @transform_2(%arg0: i32, %arg1: i32) -> (i32, i32) {
    %c0_i32 = arith.constant 0 : i32
    %c0_i32_0 = arith.constant 0 : i32
    return %c0_i32, %arg0 : i32, i32
  }
  func.func @transform_3(%arg0: i32, %arg1: i32) -> (i32, i32) {
    %c0_i32 = arith.constant 0 : i32
    %c0_i32_0 = arith.constant 0 : i32
    return %c0_i32, %arg0 : i32, i32
  }
  func.func @transform_4(%arg0: i32, %arg1: i32) -> (i32, i32) {
    %c0_i32 = arith.constant 0 : i32
    %c0_i32_0 = arith.constant 0 : i32
    return %c0_i32, %arg0 : i32, i32
  }
}

</mosaic_0001>

<llo_original>
// kernel: tpu_custom_call.1
$region0: #{tpu_custom_call.1}
  #allocation0 [shape = 'u32[]', space=smem, size = 0x4, offset = 0x4, fixed_abs, tag = 'smem constant byte address 0x4 - core index']
  #allocation1 [shape = 'u32[144,128]{1,0:T(1,128)}', space=vmem, size = 0x12000, scoped, tag = 'internal scratch']
  %s0 = inlined_call_operand.hbm [shape: f32[8,32], index: 0, kind: input, shape index: {}]
  %s1 = inlined_call_operand.hbm [shape: f32[32,128], index: 1, kind: input, shape index: {}]
  %s2 = inlined_call_operand.vmem [shape: f32[1,128], index: 2, kind: input, shape index: {}]
  %s3 = inlined_call_operand.vmem [shape: f32[1,128], index: 3, kind: input, shape index: {}]
  %s4 = inlined_call_operand.hbm [shape: f32[8,128], index: 4, kind: output, shape index: {}]
  %s5 = sld [smem:[#allocation0]]
  $region34: #{tpu_custom_call.1} parent=0
    _
  %s7 = ssub.s32 1, %s5
  %s8 = scalar_select 0, %s7, %s5
  $region1: #{tpu_custom_call.1} parent=0
    #allocation2 [shape = 'u8[4096]{0}', space=vmem, size = 0x1000, scoped, tag = 'input window, operand 0, single buffered']
    #allocation3 [shape = 's32[1]{0}', space=sflag, size = 0x4, scoped, tag = 'scoped memory for tpu_custom_call.1']
    #allocation4 [shape = 's32[1]{0}', space=sflag, size = 0x4, scoped, tag = 'scoped memory for tpu_custom_call.1']
    #allocation5 [shape = 'u8[16384]{0}', space=vmem, size = 0x4000, scoped, tag = 'input window, operand 1, single buffered']
    #allocation6 [shape = 's32[1]{0}', space=sflag, size = 0x4, scoped, tag = 'scoped memory for tpu_custom_call.1']
    #allocation7 [shape = 'u8[4096]{0}', space=vmem, size = 0x1000, scoped, tag = 'output window, operand 0, single buffered']
    %9 = vsyncpa [#allocation3], 0
    %10 = vsyncpa [#allocation6], 0
    %11 = vsyncpa [#allocation4], 0
    // Predicated region
    $region2: #{tpu_custom_call.1} parent=1 // pred_check
      _
    $region3: #{tpu_custom_call.1} parent=1 // pred_check_branch
      %13 = sbr.rel (0) target = $region5
    $region4: #{tpu_custom_call.1} parent=1 // pred_region
      %s15 = ssub.s32 128, 128
      %16 = vsyncadd [#allocation3], %s15
      %s18 = sshll.u32 [#allocation2], 4
      %s19 = int_to_ptr.vmem [resolvable:$true] %s18
      %21 = dma.hbm_to_vmem [thread:$0]  %s0, 128, %s19, [#allocation3]
    $region5: #{tpu_custom_call.1} parent=1 // pred_fallthru
      _
    // Predicated region
    $region6: #{tpu_custom_call.1} parent=1 // pred_check
      _
    $region7: #{tpu_custom_call.1} parent=1 // pred_check_branch
      %23 = sbr.rel (0) target = $region9
    $region8: #{tpu_custom_call.1} parent=1 // pred_region
      %s25 = ssub.s32 512, 512
      %26 = vsyncadd [#allocation6], %s25
      %s27 = sshll.u32 [#allocation5], 4
      %s28 = int_to_ptr.vmem [resolvable:$true] %s27
      %33 = dma.hbm_to_vmem [thread:$0]  %s1, 512, %s28, [#allocation6], 128, 128, 8
    $region9: #{tpu_custom_call.1} parent=1 // pred_fallthru
      _
    // Predicated region
    $region10: #{tpu_custom_call.1} parent=1 // pred_check
      _
    $region11: #{tpu_custom_call.1} parent=1 // pred_check_branch
      %35 = sbr.rel (0) target = $region13
    $region12: #{tpu_custom_call.1} parent=1 // pred_region
      _
    $region13: #{tpu_custom_call.1} parent=1 // pred_fallthru
      _
    // Predicated region
    $region14: #{tpu_custom_call.1} parent=1 // pred_check
      _
    $region15: #{tpu_custom_call.1} parent=1 // pred_check_branch
      %37 = sbr.rel (0) target = $region17
    $region16: #{tpu_custom_call.1} parent=1 // pred_region
      _
    $region17: #{tpu_custom_call.1} parent=1 // pred_fallthru
      _
    // Predicated region
    $region18: #{tpu_custom_call.1} parent=1 // pred_check
      _
    $region19: #{tpu_custom_call.1} parent=1 // pred_check_branch
      %39 = sbr.rel (0) target = $region21
    $region20: #{tpu_custom_call.1} parent=1 // pred_region
      %40 = dma.done [#allocation3], 128
    $region21: #{tpu_custom_call.1} parent=1 // pred_fallthru
      _
    // Predicated region
    $region22: #{tpu_custom_call.1} parent=1 // pred_check
      _
    $region23: #{tpu_custom_call.1} parent=1 // pred_check_branch
      %42 = sbr.rel (0) target = $region25
    $region24: #{tpu_custom_call.1} parent=1 // pred_region
      %43 = dma.done [#allocation6], 512
    $region25: #{tpu_custom_call.1} parent=1 // pred_fallthru
      _
    %v44 = vld [vmem:[#allocation2] sm:$0xff]
    %v45 = vld [vmem:[#allocation5] sm:$0xff]
    %v46 = vld [vmem:[#allocation5 + $0x8] sm:$0xff]
    %v47 = vld [vmem:[#allocation5 + $0x10] sm:$0xff]
    %v48 = vld [vmem:[#allocation5 + $0x18] sm:$0xff]
    %vm49 = vcmask 261120
    %v51 = vsel %vm49, %v44, 0
    %53 = vmatprep.subr.mxu0 0.0
    %54 = vmatpush1.msra.mxu0 %v45
    %55 = vmatprep.subr.mxu0 0.0
    %56 = vmatpush1.msra.mxu0 %v46
    %57 = vmatprep.subr.mxu0 0.0
    %58 = vmatpush1.msra.mxu0 %v47
    %59 = vmatprep.subr.mxu0 0.0
    %60 = vmatpush1.msra.mxu0 %v48
    %61 = vmatprep.subr.mxu0 0.0
    %62 = vmatpush1.msra.mxu0 0.0
    %63 = vmatprep.subr.mxu0 0.0
    %64 = vmatpush1.msra.mxu0 0.0
    %65 = vmatprep.subr.mxu0 0.0
    %66 = vmatpush1.msra.mxu0 0.0
    %67 = vmatprep.subr.mxu0 0.0
    %68 = vmatpush1.msra.mxu0 0.0
    %69 = vmatprep.subr.mxu0 0.0
    %70 = vmatpush1.msra.mxu0 0.0
    %71 = vmatprep.subr.mxu0 0.0
    %72 = vmatpush1.msra.mxu0 0.0
    %73 = vmatprep.subr.mxu0 0.0
    %74 = vmatpush1.msra.mxu0 0.0
    %75 = vmatprep.subr.mxu0 0.0
    %76 = vmatpush1.msra.mxu0 0.0
    %77 = vmatprep.subr.mxu0 0.0
    %78 = vmatpush1.msra.mxu0 0.0
    %79 = vmatprep.subr.mxu0 0.0
    %80 = vmatpush1.msra.mxu0 0.0
    %81 = vmatprep.subr.mxu0 0.0
    %82 = vmatpush1.msra.mxu0 0.0
    %83 = vmatprep.subr.mxu0 0.0
    %84 = vmatpush1.msra.mxu0 0.0
    %85 = vmatprep.subr.mxu0 0.0
    %86 = vmatpush1.msra.mxu0 0.0
    %87 = vmatprep.subr.mxu0 0.0
    %88 = vmatpush1.msra.mxu0 0.0
    %89 = vmatprep.subr.mxu0 0.0
    %90 = vmatpush1.msra.mxu0 0.0
    %91 = vmatprep.subr.mxu0 0.0
    %92 = vmatpush1.msra.mxu0 0.0
    %93 = vmatprep.subr.mxu0 0.0
    %94 = vmatpush1.msra.mxu0 0.0
    %95 = vmatprep.subr.mxu0 0.0
    %96 = vmatpush1.msra.mxu0 0.0
    %97 = vmatprep.subr.mxu0 0.0
    %98 = vmatpush1.msra.mxu0 0.0
    %99 = vmatprep.subr.mxu0 0.0
    %100 = vmatpush1.msra.mxu0 0.0
    %101 = vmatprep.subr.mxu0 0.0
    %102 = vmatpush1.msra.mxu0 0.0
    %103 = vmatprep.subr.mxu0 0.0
    %104 = vmatpush1.msra.mxu0 0.0
    %105 = vmatprep.subr.mxu0 0.0
    %106 = vmatpush1.msra.mxu0 0.0
    %107 = vmatprep.subr.mxu0 0.0
    %108 = vmatpush1.msra.mxu0 0.0
    %109 = vmatprep.subr.mxu0 0.0
    %110 = vmatpush1.msra.mxu0 0.0
    %111 = vmatprep.subr.mxu0 0.0
    %112 = vmatpush1.msra.mxu0 0.0
    %113 = vmatprep.subr.mxu0 0.0
    %114 = vmatpush1.msra.mxu0 0.0
    %115 = vmatprep.subr.mxu0 0.0
    %116 = vmatpush1.msra.mxu0 0.0
    %117 = vmatprep.mubr.f32.mxu0 0.0
    %118 = vmatmul.mubr.f32.gmra.mrb[0].mxu0 %v51
    %v119 = vpop.f32.mrb[0].mxu0
    %v120 = vadd.f32 0.0, %v119
    %v121 = vpop.f32.mrb[0].mxu0
    %122 = vdwg.mxu0
    %v123 = vld [vmem:[%s2] sm:$0x1]
    %v124 = vld [vmem:[%s3] sm:$0x1]
    %v125 = vrot.slane %v120, 4
    %v126 = vadd.f32 %v120, %v125
    %v127 = vrot.slane %v126, 2
    %v128 = vadd.f32 %v126, %v127
    %v129 = vrot.slane %v128, 1
    %v130 = vadd.f32 %v128, %v129
    %v131 = vmul.f32 %v130, 0.125
    %v132 = vmul.f32 %v120, %v120
    %v133 = vrot.slane %v132, 4
    %v134 = vadd.f32 %v132, %v133
    %v135 = vrot.slane %v134, 2
    %v136 = vadd.f32 %v134, %v135
    %v137 = vrot.slane %v136, 1
    %v138 = vadd.f32 %v136, %v137
    %v139 = vmul.f32 %v138, 0.125
    %v140 = vmul.f32 %v131, %v131
    %v141 = vsub.f32 %v139, %v140
    %v142 = vmax.f32 %v141, 0.0
    %v143 = vadd.f32 %v142, 1e-05
    %v144 = vrsqrt.pop %v143
    %v145 = vmul.f32 %v123, %v144
    %v146 = vmul.f32 %v131, %v145
    %v147 = vsub.f32 %v124, %v146
    %v149 = vlaneseq
    %v150 = vshrl.u32 %v149, 7
    %v151 = vsub.s32 0, %v150
    %v152 = vrot.slane %v145, %v151
    %v154 = vmul.f32 %v120, %v152
    %v156 = vlaneseq
    %v157 = vshrl.u32 %v156, 7
    %v158 = vsub.s32 0, %v157
    %v159 = vrot.slane %v147, %v158
    %v161 = vadd.f32 %v154, %v159
    %v162 = vmax.f32 %v161, 0.0
    %163 = vst [vmem:[#allocation7] sm:$0xff] %v162
    // Predicated region
    $region26: #{tpu_custom_call.1} parent=1 // pred_check
      _
    $region27: #{tpu_custom_call.1} parent=1 // pred_check_branch
      %165 = sbr.rel (0) target = $region29
    $region28: #{tpu_custom_call.1} parent=1 // pred_region
      %s167 = ssub.s32 128, 128
      %168 = vsyncadd [#allocation4], %s167
      %s170 = sshll.u32 [#allocation7], 4
      %s171 = int_to_ptr.vmem [resolvable:$true] %s170
      %173 = dma.vmem_to_hbm [thread:$0]  %s171, 128, %s4, [#allocation4]
    $region29: #{tpu_custom_call.1} parent=1 // pred_fallthru
      _
    // Predicated region
    $region30: #{tpu_custom_call.1} parent=1 // pred_check
      _
    $region31: #{tpu_custom_call.1} parent=1 // pred_check_branch
      %175 = sbr.rel (0) target = $region33
    $region32: #{tpu_custom_call.1} parent=1 // pred_region
      %176 = dma.done [#allocation4], 128
    $region33: #{tpu_custom_call.1} parent=1 // pred_fallthru
      _
    %177 = vsyncpa [#allocation3], 1
    %178 = vsyncpa [#allocation6], 1
    %179 = vsyncpa [#allocation4], 1

</llo_original>
